<compile_context>
chip_gen: v6e
topology: v6e:2x2x1
jax: 0.10.0
libtpu: 0.0.40
codegen_flags: <defaults>
</compile_context>

<pallas_src>
import functools

import jax
import jax.numpy as jnp
from jax import lax
from jax.experimental import pallas as pl
from jax.experimental.pallas import tpu as pltpu


def _pad_to(n, m=128):
    return ((n + m - 1) // m) * m


def _snet_kernel(*refs, layer_meta):
    """Fused SNet forward.

    refs = (x_ref, <per layer: ws_ref [, wd_ref] [, b_ref]>, o_ref)
    layer_meta = tuple of (tied, has_bias, keep_norm) python bools per layer.
    """
    it = iter(refs)
    x_ref = next(it)
    ws_refs, wd_refs, b_refs = [], [], []
    for (tied, has_bias, _) in layer_meta:
        ws_refs.append(next(it))
        wd_refs.append(None if tied else next(it))
        b_refs.append(next(it) if has_bias else None)
    o_ref = next(it)

    h = x_ref[...].astype(jnp.float32)

    # keepNorm preserves each row's L2 norm, so the norm entering every
    # keep_norm layer equals the (first computed) norm as long as all preceding
    # layers also had keep_norm=True.  Compute it once and reuse.
    hoisted_norm = None
    norm_valid = True  # python-level invariant tracking (static unroll)

    for li, (tied, has_bias, keep_norm) in enumerate(layer_meta):
        h_bf = h.astype(jnp.bfloat16)
        y = jnp.dot(h_bf, ws_refs[li][...], preferred_element_type=jnp.float32)
        if not tied:
            # Split-sign difference term: |h| @ Wd^T (no lane-dim concat).
            habs_bf = jnp.abs(h).astype(jnp.bfloat16)
            y = y + jnp.dot(habs_bf, wd_refs[li][...],
                            preferred_element_type=jnp.float32)
        if has_bias:
            y = y + b_refs[li][...]                 # (1, Fout) broadcast, f32
        if keep_norm:
            if norm_valid:
                if hoisted_norm is None:
                    hoisted_norm = jnp.sqrt(
                        jnp.sum(h * h, axis=-1, keepdims=True))
                norm_h = hoisted_norm
            else:
                norm_h = jnp.sqrt(jnp.sum(h * h, axis=-1, keepdims=True))
            sum_y2 = jnp.sum(y * y, axis=-1, keepdims=True)
            # |x| * 1/|y| via one sqrt + one EUP rsqrt, no true divide.
            y = y * (norm_h * lax.rsqrt(sum_y2 + 1e-12))
        else:
            norm_valid = False
        h = y
    o_ref[...] = h.astype(o_ref.dtype)


def _pick_batch_tile(B):
    # Large lane/sublane-friendly tiles (per-grid-step overhead ~0.35 us), but
    # keep >=2 steps when possible so the "parallel" batch axis can shard
    # across v7x's two TensorCores (no-op on single-TC v5e/v6e).
    for tb in (1024, 512, 256, 128):
        if B % tb == 0 and B // tb >= 2:
            return tb
    if B >= 16 and B % 16 == 0:
        return B // 2            # two 8-aligned halves -> 2 parallel blocks
    return B                     # tiny batch: single full-array block


def snet_forward(x, layers, out_dtype=jnp.float32):
    """Run the full SNet stack in one pallas_call.

    x: [B, in_features]; layers: list built by init_snet_params.
    """
    B, Fin = x.shape
    assert Fin == layers[0]["fin"]
    Fin_pad = layers[0]["fin_pad"]
    Fout = layers[-1]["fout"]
    Fout_pad = layers[-1]["fout_pad"]

    # Zero-pad the feature dim to lane-dense width once, outside the kernel.
    xp = x.astype(jnp.float32)
    if Fin_pad != Fin:
        xp = jnp.pad(xp, ((0, 0), (0, Fin_pad - Fin)))

    tb = _pick_batch_tile(B)
    grid = (B // tb,)

    layer_meta = tuple(
        (l["wd"] is None, l["b"] is not None, l["keep_norm"]) for l in layers)

    in_specs = [pl.BlockSpec((tb, Fin_pad), lambda i: (i, 0))]
    operands = [xp]
    param_bytes = 0
    for l in layers:
        in_specs.append(pl.BlockSpec(l["ws"].shape, lambda i: (0, 0)))
        operands.append(l["ws"])
        param_bytes += int(l["ws"].size) * l["ws"].dtype.itemsize
        if l["wd"] is not None:
            in_specs.append(pl.BlockSpec(l["wd"].shape, lambda i: (0, 0)))
            operands.append(l["wd"])
            param_bytes += int(l["wd"].size) * l["wd"].dtype.itemsize
        if l["b"] is not None:
            in_specs.append(pl.BlockSpec(l["b"].shape, lambda i: (0, 0)))
            operands.append(l["b"])
            param_bytes += int(l["b"].size) * l["b"].dtype.itemsize

    # Explicit VMEM budget: resident params are double-buffered by default;
    # activations (bf16 + f32 copies, in/out tiles) get a generous multiplier.
    max_width = max([Fin_pad] + [l["fout_pad"] for l in layers])
    act_bytes = tb * max_width * 4
    needed = 2 * param_bytes + 8 * act_bytes + (8 << 20)
    try:
        vmem_cap = int(pltpu.get_tpu_info().vmem_capacity_bytes * 0.85)
    except Exception:
        vmem_cap = 56 << 20      # safe under v7x's 64 MiB physical VMEM
    vmem_limit = int(min(max(needed, 32 << 20), vmem_cap))

    kernel = functools.partial(_snet_kernel, layer_meta=layer_meta)
    out = pl.pallas_call(
        kernel,
        out_shape=jax.ShapeDtypeStruct((B, Fout_pad), out_dtype),
        grid=grid,
        in_specs=in_specs,
        out_specs=pl.BlockSpec((tb, Fout_pad), lambda i: (i, 0)),
        compiler_params=pltpu.CompilerParams(
            dimension_semantics=("parallel",),
            vmem_limit_bytes=vmem_limit),
    )(*operands)
    # Slice off the zero padding outside the kernel (store stays lane-dense).
    return out[:, :Fout]


def init_snet_params(key, in_features, out_features, hidden_layers,
                     hidden_features, pad_to=128):
    """Build kernel-ready per-block params mimicking SNet.__init__.

    Returns a list of dicts per block:
      ws: [Fin_pad, Fout_pad] bf16 = pad(((Wp+Wn)/2)^T)
      wd: [Fin_pad, Fout_pad] bf16 = pad(((Wp-Wn)/2)^T), or None if Wp==Wn
      b:  (1, Fout_pad) f32 bias or None
      keep_norm: python bool; fin/fout/fin_pad/fout_pad: ints
    """
    if hidden_features is None:
        hidden_features = max(in_features, out_features)
    L = hidden_layers

    # (Fout, Fin, has_bias, keep_norm) per block (PyTorch Linear is [out, in]).
    dims = [(hidden_features, in_features, False, True)]            # inLayer
    for _ in range(L - 2):                                           # hidden
        dims.append((hidden_features, hidden_features, True, True))
    dims.append((out_features, hidden_features, False, False))       # outLayer

    blocks = []
    for (fo, fi, has_bias, keep_norm) in dims:
        key, k1, k2 = jax.random.split(key, 3)
        scale = 1.0 / float(fi) ** 0.5
        w_p = jax.random.uniform(k1, (fo, fi), jnp.float32, -scale, scale)
        w_n = jax.random.uniform(k2, (fo, fi), jnp.float32, -scale, scale)
        b = None
        if has_bias:
            key, kb = jax.random.split(key)
            b = jax.random.uniform(kb, (fo,), jnp.float32, -scale, scale)
        blocks.append({"w_p": w_p, "w_n": w_n, "b": b,
                       "keep_norm": keep_norm, "tied": False})

    # Weight tying / pseudo-inverse symmetry from SNet.__init__ (done on the
    # UNpadded weights, exactly as the reference does).
    for t in range(L // 2):
        blocks[t]["w_n"] = blocks[t]["w_p"]
        blocks[t]["tied"] = True
        w_inv = jnp.linalg.pinv(blocks[t]["w_p"])
        blocks[L - t - 1]["w_p"] = w_inv
        blocks[L - t - 1]["w_n"] = w_inv
        blocks[L - t - 1]["tied"] = True

    # Re-parameterize (Ws/Wd), pre-transpose, zero-pad to lane-dense widths and
    # pre-cast matmul operands to bf16 ONCE so the forward path is kernel-only.
    layers = []
    for blk in blocks:
        fo, fi = blk["w_p"].shape
        fo_p, fi_p = _pad_to(fo, pad_to), _pad_to(fi, pad_to)
        w_s = 0.5 * (blk["w_p"] + blk["w_n"])                  # [fo, fi]
        ws = jnp.zeros((fi_p, fo_p), jnp.float32).at[:fi, :fo].set(
            jnp.transpose(w_s)).astype(jnp.bfloat16)
        wd = None
        if not blk["tied"]:
            w_d = 0.5 * (blk["w_p"] - blk["w_n"])
            wd = jnp.zeros((fi_p, fo_p), jnp.float32).at[:fi, :fo].set(
                jnp.transpose(w_d)).astype(jnp.bfloat16)
        b = None
        if blk["b"] is not None:
            b = jnp.zeros((1, fo_p), jnp.float32).at[0, :fo].set(blk["b"])
        layers.append({"ws": ws, "wd": wd, "b": b,
                       "keep_norm": blk["keep_norm"],
                       "fin": fi, "fout": fo,
                       "fin_pad": fi_p, "fout_pad": fo_p})
    return layers


if __name__ == "__main__":
    key = jax.random.PRNGKey(0)
    in_features = 8
    out_features = 8            # must equal in_features for the pinv tying
    hidden_features = 32
    hidden_layers = 5           # odd -> exercises both tied and untied paths
    batch = 4

    k_param, k_x = jax.random.split(key)
    layers = init_snet_params(k_param, in_features, out_features,
                              hidden_layers, hidden_features)
    x = jax.random.normal(k_x, (batch, in_features), jnp.float32)

    y = snet_forward(x, layers)
    jax.block_until_ready(y)
    assert y.shape == (batch, out_features)
    assert bool(jnp.all(jnp.isfinite(y)))
    print("KERNEL_OK")
</pallas_src>

<mosaic_0001>
module attributes {stable_mosaic.version = 11 : i64} {
  func.func @_snet_kernel(%arg0: i32, %arg1: memref<4x128xf32, #tpu.memory_space<vmem>>, %arg2: memref<128x128xbf16, #tpu.memory_space<vmem>>, %arg3: memref<128x128xbf16, #tpu.memory_space<vmem>>, %arg4: memref<1x128xf32, #tpu.memory_space<vmem>>, %arg5: memref<128x128xbf16, #tpu.memory_space<vmem>>, %arg6: memref<128x128xbf16, #tpu.memory_space<vmem>>, %arg7: memref<1x128xf32, #tpu.memory_space<vmem>>, %arg8: memref<128x128xbf16, #tpu.memory_space<vmem>>, %arg9: memref<1x128xf32, #tpu.memory_space<vmem>>, %arg10: memref<128x128xbf16, #tpu.memory_space<vmem>>, %arg11: memref<4x128xf32, #tpu.memory_space<vmem>>) attributes {dimension_semantics = [#tpu.dimension_semantics<parallel>], iteration_bounds = array<i64: 1>, scalar_prefetch = 0 : i64, scratch_operands = 0 : i64, tpu.core_type = #tpu.core_type<tc>, window_params = [{transform_indices = @transform_0, window_bounds = array<i64: 4, 128>}, {pipeline_mode = #tpu.pipeline_mode<synchronous>, transform_indices = @transform_1, window_bounds = array<i64: 128, 128>}, {pipeline_mode = #tpu.pipeline_mode<synchronous>, transform_indices = @transform_2, window_bounds = array<i64: 128, 128>}, {pipeline_mode = #tpu.pipeline_mode<synchronous>, transform_indices = @transform_3, window_bounds = array<i64: 1, 128>}, {pipeline_mode = #tpu.pipeline_mode<synchronous>, transform_indices = @transform_4, window_bounds = array<i64: 128, 128>}, {pipeline_mode = #tpu.pipeline_mode<synchronous>, transform_indices = @transform_5, window_bounds = array<i64: 128, 128>}, {pipeline_mode = #tpu.pipeline_mode<synchronous>, transform_indices = @transform_6, window_bounds = array<i64: 1, 128>}, {pipeline_mode = #tpu.pipeline_mode<synchronous>, transform_indices = @transform_7, window_bounds = array<i64: 128, 128>}, {pipeline_mode = #tpu.pipeline_mode<synchronous>, transform_indices = @transform_8, window_bounds = array<i64: 1, 128>}, {pipeline_mode = #tpu.pipeline_mode<synchronous>, transform_indices = @transform_9, window_bounds = array<i64: 128, 128>}, {transform_indices = @transform_10, window_bounds = array<i64: 4, 128>}]} {
    %c0 = arith.constant 0 : index
    %c0_0 = arith.constant 0 : index
    %0 = vector.load %arg1[%c0, %c0_0] : memref<4x128xf32, #tpu.memory_space<vmem>>, vector<4x128xf32>
    %1 = arith.truncf %0 : vector<4x128xf32> to vector<4x128xbf16>
    %c0_1 = arith.constant 0 : index
    %c0_2 = arith.constant 0 : index
    %2 = vector.load %arg2[%c0_1, %c0_2] : memref<128x128xbf16, #tpu.memory_space<vmem>>, vector<128x128xbf16>
    %cst = arith.constant dense<0.000000e+00> : vector<4x128xf32>
    %3 = tpu.matmul %1, %2, %cst {dimension_numbers = #tpu.dot_dimension_numbers<[1], [0], [0], [1], [0, 0, 1, 1], [], []>} : vector<4x128xbf16>, vector<128x128xbf16>, vector<4x128xf32> -> vector<4x128xf32>
    %4 = arith.mulf %0, %0 : vector<4x128xf32>
    %cst_3 = arith.constant dense<0.000000e+00> : vector<4xf32>
    %5 = vector.multi_reduction <add>, %4, %cst_3 [1] : vector<4x128xf32> to vector<4xf32>
    %6 = vector.shape_cast %5 : vector<4xf32> to vector<4x1xf32>
    %7 = math.sqrt %6 : vector<4x1xf32>
    %8 = arith.mulf %3, %3 : vector<4x128xf32>
    %cst_4 = arith.constant dense<0.000000e+00> : vector<4xf32>
    %9 = vector.multi_reduction <add>, %8, %cst_4 [1] : vector<4x128xf32> to vector<4xf32>
    %10 = vector.shape_cast %9 : vector<4xf32> to vector<4x1xf32>
    %cst_5 = arith.constant 9.99999996E-13 : f32
    %11 = vector.broadcast %cst_5 : f32 to vector<4x1xf32>
    %12 = arith.addf %10, %11 : vector<4x1xf32>
    %13 = math.rsqrt %12 : vector<4x1xf32>
    %14 = arith.mulf %7, %13 : vector<4x1xf32>
    %15 = vector.broadcast %14 : vector<4x1xf32> to vector<4x128xf32>
    %16 = arith.mulf %3, %15 : vector<4x128xf32>
    %17 = arith.truncf %16 : vector<4x128xf32> to vector<4x128xbf16>
    %c0_6 = arith.constant 0 : index
    %c0_7 = arith.constant 0 : index
    %18 = vector.load %arg3[%c0_6, %c0_7] : memref<128x128xbf16, #tpu.memory_space<vmem>>, vector<128x128xbf16>
    %cst_8 = arith.constant dense<0.000000e+00> : vector<4x128xf32>
    %19 = tpu.matmul %17, %18, %cst_8 {dimension_numbers = #tpu.dot_dimension_numbers<[1], [0], [0], [1], [0, 0, 1, 1], [], []>} : vector<4x128xbf16>, vector<128x128xbf16>, vector<4x128xf32> -> vector<4x128xf32>
    %c0_9 = arith.constant 0 : index
    %c0_10 = arith.constant 0 : index
    %20 = vector.load %arg4[%c0_9, %c0_10] : memref<1x128xf32, #tpu.memory_space<vmem>>, vector<1x128xf32>
    %21 = vector.broadcast %20 : vector<1x128xf32> to vector<4x128xf32>
    %22 = arith.addf %19, %21 : vector<4x128xf32>
    %23 = arith.mulf %22, %22 : vector<4x128xf32>
    %cst_11 = arith.constant dense<0.000000e+00> : vector<4xf32>
    %24 = vector.multi_reduction <add>, %23, %cst_11 [1] : vector<4x128xf32> to vector<4xf32>
    %25 = vector.shape_cast %24 : vector<4xf32> to vector<4x1xf32>
    %cst_12 = arith.constant 9.99999996E-13 : f32
    %26 = vector.broadcast %cst_12 : f32 to vector<4x1xf32>
    %27 = arith.addf %25, %26 : vector<4x1xf32>
    %28 = math.rsqrt %27 : vector<4x1xf32>
    %29 = arith.mulf %7, %28 : vector<4x1xf32>
    %30 = vector.broadcast %29 : vector<4x1xf32> to vector<4x128xf32>
    %31 = arith.mulf %22, %30 : vector<4x128xf32>
    %32 = arith.truncf %31 : vector<4x128xf32> to vector<4x128xbf16>
    %c0_13 = arith.constant 0 : index
    %c0_14 = arith.constant 0 : index
    %33 = vector.load %arg5[%c0_13, %c0_14] : memref<128x128xbf16, #tpu.memory_space<vmem>>, vector<128x128xbf16>
    %cst_15 = arith.constant dense<0.000000e+00> : vector<4x128xf32>
    %34 = tpu.matmul %32, %33, %cst_15 {dimension_numbers = #tpu.dot_dimension_numbers<[1], [0], [0], [1], [0, 0, 1, 1], [], []>} : vector<4x128xbf16>, vector<128x128xbf16>, vector<4x128xf32> -> vector<4x128xf32>
    %35 = math.absf %31 : vector<4x128xf32>
    %36 = arith.truncf %35 : vector<4x128xf32> to vector<4x128xbf16>
    %c0_16 = arith.constant 0 : index
    %c0_17 = arith.constant 0 : index
    %37 = vector.load %arg6[%c0_16, %c0_17] : memref<128x128xbf16, #tpu.memory_space<vmem>>, vector<128x128xbf16>
    %cst_18 = arith.constant dense<0.000000e+00> : vector<4x128xf32>
    %38 = tpu.matmul %36, %37, %cst_18 {dimension_numbers = #tpu.dot_dimension_numbers<[1], [0], [0], [1], [0, 0, 1, 1], [], []>} : vector<4x128xbf16>, vector<128x128xbf16>, vector<4x128xf32> -> vector<4x128xf32>
    %39 = arith.addf %34, %38 : vector<4x128xf32>
    %c0_19 = arith.constant 0 : index
    %c0_20 = arith.constant 0 : index
    %40 = vector.load %arg7[%c0_19, %c0_20] : memref<1x128xf32, #tpu.memory_space<vmem>>, vector<1x128xf32>
    %41 = vector.broadcast %40 : vector<1x128xf32> to vector<4x128xf32>
    %42 = arith.addf %39, %41 : vector<4x128xf32>
    %43 = arith.mulf %42, %42 : vector<4x128xf32>
    %cst_21 = arith.constant dense<0.000000e+00> : vector<4xf32>
    %44 = vector.multi_reduction <add>, %43, %cst_21 [1] : vector<4x128xf32> to vector<4xf32>
    %45 = vector.shape_cast %44 : vector<4xf32> to vector<4x1xf32>
    %cst_22 = arith.constant 9.99999996E-13 : f32
    %46 = vector.broadcast %cst_22 : f32 to vector<4x1xf32>
    %47 = arith.addf %45, %46 : vector<4x1xf32>
    %48 = math.rsqrt %47 : vector<4x1xf32>
    %49 = arith.mulf %7, %48 : vector<4x1xf32>
    %50 = vector.broadcast %49 : vector<4x1xf32> to vector<4x128xf32>
    %51 = arith.mulf %42, %50 : vector<4x128xf32>
    %52 = arith.truncf %51 : vector<4x128xf32> to vector<4x128xbf16>
    %c0_23 = arith.constant 0 : index
    %c0_24 = arith.constant 0 : index
    %53 = vector.load %arg8[%c0_23, %c0_24] : memref<128x128xbf16, #tpu.memory_space<vmem>>, vector<128x128xbf16>
    %cst_25 = arith.constant dense<0.000000e+00> : vector<4x128xf32>
    %54 = tpu.matmul %52, %53, %cst_25 {dimension_numbers = #tpu.dot_dimension_numbers<[1], [0], [0], [1], [0, 0, 1, 1], [], []>} : vector<4x128xbf16>, vector<128x128xbf16>, vector<4x128xf32> -> vector<4x128xf32>
    %c0_26 = arith.constant 0 : index
    %c0_27 = arith.constant 0 : index
    %55 = vector.load %arg9[%c0_26, %c0_27] : memref<1x128xf32, #tpu.memory_space<vmem>>, vector<1x128xf32>
    %56 = vector.broadcast %55 : vector<1x128xf32> to vector<4x128xf32>
    %57 = arith.addf %54, %56 : vector<4x128xf32>
    %58 = arith.mulf %57, %57 : vector<4x128xf32>
    %cst_28 = arith.constant dense<0.000000e+00> : vector<4xf32>
    %59 = vector.multi_reduction <add>, %58, %cst_28 [1] : vector<4x128xf32> to vector<4xf32>
    %60 = vector.shape_cast %59 : vector<4xf32> to vector<4x1xf32>
    %cst_29 = arith.constant 9.99999996E-13 : f32
    %61 = vector.broadcast %cst_29 : f32 to vector<4x1xf32>
    %62 = arith.addf %60, %61 : vector<4x1xf32>
    %63 = math.rsqrt %62 : vector<4x1xf32>
    %64 = arith.mulf %7, %63 : vector<4x1xf32>
    %65 = vector.broadcast %64 : vector<4x1xf32> to vector<4x128xf32>
    %66 = arith.mulf %57, %65 : vector<4x128xf32>
    %67 = arith.truncf %66 : vector<4x128xf32> to vector<4x128xbf16>
    %c0_30 = arith.constant 0 : index
    %c0_31 = arith.constant 0 : index
    %68 = vector.load %arg10[%c0_30, %c0_31] : memref<128x128xbf16, #tpu.memory_space<vmem>>, vector<128x128xbf16>
    %cst_32 = arith.constant dense<0.000000e+00> : vector<4x128xf32>
    %69 = tpu.matmul %67, %68, %cst_32 {dimension_numbers = #tpu.dot_dimension_numbers<[1], [0], [0], [1], [0, 0, 1, 1], [], []>} : vector<4x128xbf16>, vector<128x128xbf16>, vector<4x128xf32> -> vector<4x128xf32>
    %c0_33 = arith.constant 0 : index
    %c0_34 = arith.constant 0 : index
    %70 = vector.load %arg11[%c0_33, %c0_34] : memref<4x128xf32, #tpu.memory_space<vmem>>, vector<4x128xf32>
    tpu.vector_store %arg11[%c0_33, %c0_34], %69 {strides = array<i32>} : memref<4x128xf32, #tpu.memory_space<vmem>>, vector<4x128xf32>,
    return
  }
  func.func @transform_0(%arg0: i32) -> (i32, i32) {
    %c0_i32 = arith.constant 0 : i32
    %c0_i32_0 = arith.constant 0 : i32
    return %arg0, %c0_i32 : i32, i32
  }
  func.func @transform_1(%arg0: i32) -> (i32, i32) {
    %c0_i32 = arith.constant 0 : i32
    %c0_i32_0 = arith.constant 0 : i32
    %c0_i32_1 = arith.constant 0 : i32
    return %c0_i32, %c0_i32_0 : i32, i32
  }
  func.func @transform_2(%arg0: i32) -> (i32, i32) {
    %c0_i32 = arith.constant 0 : i32
    %c0_i32_0 = arith.constant 0 : i32
    %c0_i32_1 = arith.constant 0 : i32
    return %c0_i32, %c0_i32_0 : i32, i32
  }
  func.func @transform_3(%arg0: i32) -> (i32, i32) {
    %c0_i32 = arith.constant 0 : i32
    %c0_i32_0 = arith.constant 0 : i32
    %c0_i32_1 = arith.constant 0 : i32
    return %c0_i32, %c0_i32_0 : i32, i32
  }
  func.func @transform_4(%arg0: i32) -> (i32, i32) {
    %c0_i32 = arith.constant 0 : i32
    %c0_i32_0 = arith.constant 0 : i32
    %c0_i32_1 = arith.constant 0 : i32
    return %c0_i32, %c0_i32_0 : i32, i32
  }
  func.func @transform_5(%arg0: i32) -> (i32, i32) {
    %c0_i32 = arith.constant 0 : i32
    %c0_i32_0 = arith.constant 0 : i32
    %c0_i32_1 = arith.constant 0 : i32
    return %c0_i32, %c0_i32_0 : i32, i32
  }
  func.func @transform_6(%arg0: i32) -> (i32, i32) {
    %c0_i32 = arith.constant 0 : i32
    %c0_i32_0 = arith.constant 0 : i32
    %c0_i32_1 = arith.constant 0 : i32
    return %c0_i32, %c0_i32_0 : i32, i32
  }
  func.func @transform_7(%arg0: i32) -> (i32, i32) {
    %c0_i32 = arith.constant 0 : i32
    %c0_i32_0 = arith.constant 0 : i32
    %c0_i32_1 = arith.constant 0 : i32
    return %c0_i32, %c0_i32_0 : i32, i32
  }
  func.func @transform_8(%arg0: i32) -> (i32, i32) {
    %c0_i32 = arith.constant 0 : i32
    %c0_i32_0 = arith.constant 0 : i32
    %c0_i32_1 = arith.constant 0 : i32
    return %c0_i32, %c0_i32_0 : i32, i32
  }
  func.func @transform_9(%arg0: i32) -> (i32, i32) {
    %c0_i32 = arith.constant 0 : i32
    %c0_i32_0 = arith.constant 0 : i32
    %c0_i32_1 = arith.constant 0 : i32
    return %c0_i32, %c0_i32_0 : i32, i32
  }
  func.func @transform_10(%arg0: i32) -> (i32, i32) {
    %c0_i32 = arith.constant 0 : i32
    %c0_i32_0 = arith.constant 0 : i32
    return %arg0, %c0_i32 : i32, i32
  }
}

</mosaic_0001>

<llo_original>
// kernel: tpu_custom_call.1
$region0: #{tpu_custom_call.1}
  #allocation0 [shape = 'u32[]', space=smem, size = 0x4, offset = 0x4, fixed_abs, tag = 'smem constant byte address 0x4 - core index']
  #allocation1 [shape = 'u32[144,128]{1,0:T(1,128)}', space=vmem, size = 0x12000, scoped, tag = 'internal scratch']
  %s0 = inlined_call_operand.hbm [shape: f32[4,128], index: 0, kind: input, shape index: {}]
  %s1 = inlined_call_operand.hbm [shape: bf16[128,128], index: 1, kind: input, shape index: {}]
  %s2 = inlined_call_operand.hbm [shape: bf16[128,128], index: 2, kind: input, shape index: {}]
  %s3 = inlined_call_operand.vmem [shape: f32[1,128], index: 3, kind: input, shape index: {}]
  %s4 = inlined_call_operand.hbm [shape: bf16[128,128], index: 4, kind: input, shape index: {}]
  %s5 = inlined_call_operand.hbm [shape: bf16[128,128], index: 5, kind: input, shape index: {}]
  %s6 = inlined_call_operand.vmem [shape: f32[1,128], index: 6, kind: input, shape index: {}]
  %s7 = inlined_call_operand.hbm [shape: bf16[128,128], index: 7, kind: input, shape index: {}]
  %s8 = inlined_call_operand.vmem [shape: f32[1,128], index: 8, kind: input, shape index: {}]
  %s9 = inlined_call_operand.hbm [shape: bf16[128,128], index: 9, kind: input, shape index: {}]
  %s10 = inlined_call_operand.hbm [shape: f32[4,128], index: 10, kind: output, shape index: {}]
  %s11 = sld [smem:[#allocation0]]
  $region78: #{tpu_custom_call.1} parent=0
    _
  %s13 = ssub.s32 1, %s11
  %s14 = scalar_select 0, %s13, %s11
  $region1: #{tpu_custom_call.1} parent=0
    #allocation2 [shape = 'u8[2048]{0}', space=vmem, size = 0x800, scoped, tag = 'input window, operand 0, single buffered']
    #allocation3 [shape = 's32[1]{0}', space=sflag, size = 0x4, scoped, tag = 'scoped memory for tpu_custom_call.1']
    #allocation4 [shape = 's32[1]{0}', space=sflag, size = 0x4, scoped, tag = 'scoped memory for tpu_custom_call.1']
    #allocation5 [shape = 'u8[32768]{0}', space=vmem, size = 0x8000, scoped, tag = 'input window, operand 1, single buffered']
    #allocation6 [shape = 's32[1]{0}', space=sflag, size = 0x4, scoped, tag = 'scoped memory for tpu_custom_call.1']
    #allocation7 [shape = 'u8[32768]{0}', space=vmem, size = 0x8000, scoped, tag = 'input window, operand 2, single buffered']
    #allocation8 [shape = 'u8[32768]{0}', space=vmem, size = 0x8000, scoped, tag = 'input window, operand 4, single buffered']
    #allocation9 [shape = 's32[1]{0}', space=sflag, size = 0x4, scoped, tag = 'scoped memory for tpu_custom_call.1']
    #allocation10 [shape = 'u8[32768]{0}', space=vmem, size = 0x8000, scoped, tag = 'input window, operand 5, single buffered']
    #allocation11 [shape = 'u8[32768]{0}', space=vmem, size = 0x8000, scoped, tag = 'input window, operand 7, single buffered']
    #allocation12 [shape = 's32[1]{0}', space=sflag, size = 0x4, scoped, tag = 'scoped memory for tpu_custom_call.1']
    #allocation13 [shape = 'u8[32768]{0}', space=vmem, size = 0x8000, scoped, tag = 'input window, operand 9, single buffered']
    #allocation14 [shape = 'u8[2048]{0}', space=vmem, size = 0x800, scoped, tag = 'output window, operand 0, single buffered']
    %15 = vsyncpa [#allocation3], 0
    %16 = vsyncpa [#allocation6], 0
    %17 = vsyncpa [#allocation9], 0
    %18 = vsyncpa [#allocation12], 0
    %19 = vsyncpa [#allocation4], 0
    // Predicated region
    $region2: #{tpu_custom_call.1} parent=1 // pred_check
      _
    $region3: #{tpu_custom_call.1} parent=1 // pred_check_branch
      %21 = sbr.rel (0) target = $region5
    $region4: #{tpu_custom_call.1} parent=1 // pred_region
      %s23 = ssub.s32 64, 64
      %24 = vsyncadd [#allocation3], %s23
      %s26 = sshll.u32 [#allocation2], 4
      %s27 = int_to_ptr.vmem [resolvable:$true] %s26
      %29 = dma.hbm_to_vmem [thread:$0]  %s0, 64, %s27, [#allocation3]
    $region5: #{tpu_custom_call.1} parent=1 // pred_fallthru
      _
    // Predicated region
    $region6: #{tpu_custom_call.1} parent=1 // pred_check
      _
    $region7: #{tpu_custom_call.1} parent=1 // pred_check_branch
      %31 = sbr.rel (0) target = $region9
    $region8: #{tpu_custom_call.1} parent=1 // pred_region
      %s33 = ssub.s32 1024, 1024
      %34 = vsyncadd [#allocation6], %s33
      %s35 = sshll.u32 [#allocation5], 4
      %s36 = int_to_ptr.vmem [resolvable:$true] %s35
      %41 = dma.hbm_to_vmem [thread:$0]  %s1, 1024, %s36, [#allocation6], 64, 64, 4
    $region9: #{tpu_custom_call.1} parent=1 // pred_fallthru
      _
    // Predicated region
    $region10: #{tpu_custom_call.1} parent=1 // pred_check
      _
    $region11: #{tpu_custom_call.1} parent=1 // pred_check_branch
      %43 = sbr.rel (0) target = $region13
    $region12: #{tpu_custom_call.1} parent=1 // pred_region
      %s45 = ssub.s32 1024, 1024
      %46 = vsyncadd [#allocation6], %s45
      %s47 = sshll.u32 [#allocation7], 4
      %s48 = int_to_ptr.vmem [resolvable:$true] %s47
      %53 = dma.hbm_to_vmem [thread:$0]  %s2, 1024, %s48, [#allocation6], 64, 64, 4
    $region13: #{tpu_custom_call.1} parent=1 // pred_fallthru
      _
    // Predicated region
    $region14: #{tpu_custom_call.1} parent=1 // pred_check
      _
    $region15: #{tpu_custom_call.1} parent=1 // pred_check_branch
      %55 = sbr.rel (0) target = $region17
    $region16: #{tpu_custom_call.1} parent=1 // pred_region
      _
    $region17: #{tpu_custom_call.1} parent=1 // pred_fallthru
      _
    // Predicated region
    $region18: #{tpu_custom_call.1} parent=1 // pred_check
      _
    $region19: #{tpu_custom_call.1} parent=1 // pred_check_branch
      %57 = sbr.rel (0) target = $region21
    $region20: #{tpu_custom_call.1} parent=1 // pred_region
      %s59 = ssub.s32 1024, 1024
      %60 = vsyncadd [#allocation9], %s59
      %s61 = sshll.u32 [#allocation8], 4
      %s62 = int_to_ptr.vmem [resolvable:$true] %s61
      %67 = dma.hbm_to_vmem [thread:$0]  %s4, 1024, %s62, [#allocation9], 64, 64, 4
    $region21: #{tpu_custom_call.1} parent=1 // pred_fallthru
      _
    // Predicated region
    $region22: #{tpu_custom_call.1} parent=1 // pred_check
      _
    $region23: #{tpu_custom_call.1} parent=1 // pred_check_branch
      %69 = sbr.rel (0) target = $region25
    $region24: #{tpu_custom_call.1} parent=1 // pred_region
      %s71 = ssub.s32 1024, 1024
      %72 = vsyncadd [#allocation9], %s71
      %s73 = sshll.u32 [#allocation10], 4
      %s74 = int_to_ptr.vmem [resolvable:$true] %s73
      %79 = dma.hbm_to_vmem [thread:$0]  %s5, 1024, %s74, [#allocation9], 64, 64, 4
    $region25: #{tpu_custom_call.1} parent=1 // pred_fallthru
      _
    // Predicated region
    $region26: #{tpu_custom_call.1} parent=1 // pred_check
      _
    $region27: #{tpu_custom_call.1} parent=1 // pred_check_branch
      %81 = sbr.rel (0) target = $region29
    $region28: #{tpu_custom_call.1} parent=1 // pred_region
      _
    $region29: #{tpu_custom_call.1} parent=1 // pred_fallthru
      _
    // Predicated region
    $region30: #{tpu_custom_call.1} parent=1 // pred_check
      _
    $region31: #{tpu_custom_call.1} parent=1 // pred_check_branch
      %83 = sbr.rel (0) target = $region33
    $region32: #{tpu_custom_call.1} parent=1 // pred_region
      %s85 = ssub.s32 1024, 1024
      %86 = vsyncadd [#allocation12], %s85
      %s87 = sshll.u32 [#allocation11], 4
      %s88 = int_to_ptr.vmem [resolvable:$true] %s87
      %93 = dma.hbm_to_vmem [thread:$0]  %s7, 1024, %s88, [#allocation12], 64, 64, 4
    $region33: #{tpu_custom_call.1} parent=1 // pred_fallthru
      _
    // Predicated region
    $region34: #{tpu_custom_call.1} parent=1 // pred_check
      _
    $region35: #{tpu_custom_call.1} parent=1 // pred_check_branch
      %95 = sbr.rel (0) target = $region37
    $region36: #{tpu_custom_call.1} parent=1 // pred_region
      _
    $region37: #{tpu_custom_call.1} parent=1 // pred_fallthru
      _
    // Predicated region
    $region38: #{tpu_custom_call.1} parent=1 // pred_check
      _
    $region39: #{tpu_custom_call.1} parent=1 // pred_check_branch
      %97 = sbr.rel (0) target = $region41
    $region40: #{tpu_custom_call.1} parent=1 // pred_region
      %s99 = ssub.s32 1024, 1024
      %100 = vsyncadd [#allocation12], %s99
      %s101 = sshll.u32 [#allocation13], 4
      %s102 = int_to_ptr.vmem [resolvable:$true] %s101
      %107 = dma.hbm_to_vmem [thread:$0]  %s9, 1024, %s102, [#allocation12], 64, 64, 4
    $region41: #{tpu_custom_call.1} parent=1 // pred_fallthru
      _
    // Predicated region
    $region42: #{tpu_custom_call.1} parent=1 // pred_check
      _
    $region43: #{tpu_custom_call.1} parent=1 // pred_check_branch
      %109 = sbr.rel (0) target = $region45
    $region44: #{tpu_custom_call.1} parent=1 // pred_region
      %110 = dma.done [#allocation3], 64
    $region45: #{tpu_custom_call.1} parent=1 // pred_fallthru
      _
    // Predicated region
    $region46: #{tpu_custom_call.1} parent=1 // pred_check
      _
    $region47: #{tpu_custom_call.1} parent=1 // pred_check_branch
      %112 = sbr.rel (0) target = $region49
    $region48: #{tpu_custom_call.1} parent=1 // pred_region
      %113 = dma.done [#allocation6], 1024
    $region49: #{tpu_custom_call.1} parent=1 // pred_fallthru
      _
    // Predicated region
    $region50: #{tpu_custom_call.1} parent=1 // pred_check
      _
    $region51: #{tpu_custom_call.1} parent=1 // pred_check_branch
      %115 = sbr.rel (0) target = $region53
    $region52: #{tpu_custom_call.1} parent=1 // pred_region
      %116 = dma.done [#allocation6], 1024
    $region53: #{tpu_custom_call.1} parent=1 // pred_fallthru
      _
    // Predicated region
    $region54: #{tpu_custom_call.1} parent=1 // pred_check
      _
    $region55: #{tpu_custom_call.1} parent=1 // pred_check_branch
      %118 = sbr.rel (0) target = $region57
    $region56: #{tpu_custom_call.1} parent=1 // pred_region
      %119 = dma.done [#allocation9], 1024
    $region57: #{tpu_custom_call.1} parent=1 // pred_fallthru
      _
    // Predicated region
    $region58: #{tpu_custom_call.1} parent=1 // pred_check
      _
    $region59: #{tpu_custom_call.1} parent=1 // pred_check_branch
      %121 = sbr.rel (0) target = $region61
    $region60: #{tpu_custom_call.1} parent=1 // pred_region
      %122 = dma.done [#allocation9], 1024
    $region61: #{tpu_custom_call.1} parent=1 // pred_fallthru
      _
    // Predicated region
    $region62: #{tpu_custom_call.1} parent=1 // pred_check
      _
    $region63: #{tpu_custom_call.1} parent=1 // pred_check_branch
      %124 = sbr.rel (0) target = $region65
    $region64: #{tpu_custom_call.1} parent=1 // pred_region
      %125 = dma.done [#allocation12], 1024
    $region65: #{tpu_custom_call.1} parent=1 // pred_fallthru
      _
    // Predicated region
    $region66: #{tpu_custom_call.1} parent=1 // pred_check
      _
    $region67: #{tpu_custom_call.1} parent=1 // pred_check_branch
      %127 = sbr.rel (0) target = $region69
    $region68: #{tpu_custom_call.1} parent=1 // pred_region
      %128 = dma.done [#allocation12], 1024
    $region69: #{tpu_custom_call.1} parent=1 // pred_fallthru
      _
    %v130 = vld [vmem:[#allocation2] sm:$0xf]
    %v131 = vpack.c.bf16 %v130, %v130
    %v132 = vld [vmem:[#allocation5] sm:$0xf]
    %v133 = vld [vmem:[#allocation5 + $0x4] sm:$0xf]
    %v134 = vld [vmem:[#allocation5 + $0x8] sm:$0xf]
    %v135 = vld [vmem:[#allocation5 + $0xc] sm:$0xf]
    %v136 = vld [vmem:[#allocation5 + $0x10] sm:$0xf]
    %v137 = vld [vmem:[#allocation5 + $0x14] sm:$0xf]
    %v138 = vld [vmem:[#allocation5 + $0x18] sm:$0xf]
    %v139 = vld [vmem:[#allocation5 + $0x1c] sm:$0xf]
    %v140 = vld [vmem:[#allocation5 + $0x20] sm:$0xf]
    %v141 = vld [vmem:[#allocation5 + $0x24] sm:$0xf]
    %v142 = vld [vmem:[#allocation5 + $0x28] sm:$0xf]
    %v143 = vld [vmem:[#allocation5 + $0x2c] sm:$0xf]
    %v144 = vld [vmem:[#allocation5 + $0x30] sm:$0xf]
    %v145 = vld [vmem:[#allocation5 + $0x34] sm:$0xf]
    %v146 = vld [vmem:[#allocation5 + $0x38] sm:$0xf]
    %v147 = vld [vmem:[#allocation5 + $0x3c] sm:$0xf]
    %v164 = vunpack.c.l.b16 %v132
    %v165 = vunpack.c.l.b16 %v133
    %v166 = vunpack.c.l.b16 %v134
    %v167 = vunpack.c.l.b16 %v135
    %v168 = vunpack.c.l.b16 %v136
    %v169 = vunpack.c.l.b16 %v137
    %v170 = vunpack.c.l.b16 %v138
    %v171 = vunpack.c.l.b16 %v139
    %v172 = vunpack.c.l.b16 %v140
    %v173 = vunpack.c.l.b16 %v141
    %v174 = vunpack.c.l.b16 %v142
    %v175 = vunpack.c.l.b16 %v143
    %v176 = vunpack.c.l.b16 %v144
    %v177 = vunpack.c.l.b16 %v145
    %v178 = vunpack.c.l.b16 %v146
    %v179 = vunpack.c.l.b16 %v147
    %v180 = vpack.c.b16 %v165, %v164
    %v181 = vpack.c.b16 %v167, %v166
    %v182 = vpack.c.b16 %v169, %v168
    %v183 = vpack.c.b16 %v171, %v170
    %v184 = vpack.c.b16 %v173, %v172
    %v185 = vpack.c.b16 %v175, %v174
    %v186 = vpack.c.b16 %v177, %v176
    %v187 = vpack.c.b16 %v179, %v178
    %196 = vmatprep.subr.bf16.mxu0 0
    %197 = vmatpush1.bf16.msra.mxu0 %v187
    %198 = vmatprep.subr.bf16.mxu0 0
    %199 = vmatpush1.bf16.msra.mxu0 %v186
    %200 = vmatprep.subr.bf16.mxu0 0
    %201 = vmatpush1.bf16.msra.mxu0 %v185
    %202 = vmatprep.subr.bf16.mxu0 0
    %203 = vmatpush1.bf16.msra.mxu0 %v184
    %204 = vmatprep.subr.bf16.mxu0 0
    %205 = vmatpush1.bf16.msra.mxu0 %v183
    %206 = vmatprep.subr.bf16.mxu0 0
    %207 = vmatpush1.bf16.msra.mxu0 %v182
    %208 = vmatprep.subr.bf16.mxu0 0
    %209 = vmatpush1.bf16.msra.mxu0 %v181
    %210 = vmatprep.subr.bf16.mxu0 0
    %211 = vmatpush1.bf16.msra.mxu0 %v180
    %212 = vmatprep.subr.bf16.mxu0 0
    %213 = vmatpush2.bf16.msra.mxu0 0
    %214 = vmatprep.subr.bf16.mxu0 0
    %215 = vmatpush2.bf16.msra.mxu0 0
    %216 = vmatprep.subr.bf16.mxu0 0
    %217 = vmatpush2.bf16.msra.mxu0 0
    %218 = vmatprep.subr.bf16.mxu0 0
    %219 = vmatpush2.bf16.msra.mxu0 0
    %220 = vmatprep.subr.bf16.mxu0 0
    %221 = vmatpush2.bf16.msra.mxu0 0
    %222 = vmatprep.subr.bf16.mxu0 0
    %223 = vmatpush2.bf16.msra.mxu0 0
    %224 = vmatprep.subr.bf16.mxu0 0
    %225 = vmatpush2.bf16.msra.mxu0 0
    %226 = vmatprep.subr.bf16.mxu0 0
    %227 = vmatpush2.bf16.msra.mxu0 0
    %228 = vmatprep.mubr.bf16.mxu0 0
    %229 = vmatmul.mubr.bf16.gmra.mxu0 %v131
    %v230 = vpop.f32.mrf.mxu0
    %v231 = vadd.f32 0.0, %v230
    %v232 = vpop.f32.mrf.mxu0
    %v233 = vpop.f32.mrf.mxu0
    %v234 = vpop.f32.mrf.mxu0
    %235 = vdwg.mxu0
    %v236 = vmul.f32 %v130, %v130
    %vm237 = vcmask 1043456
    %v238 = vsel %vm237, %v236, 0.0
    %239 = vadd.xlane.f32.xlu0 %v238
    %v240 = vpop.xlane.xlu0 %239
    %v241 = vrsqrt.pop %v240
    %v242 = vmul.f32 %v240, %v241
    %vm243 = vcmp.eq.f32.partialorder %v240, inf
    %v244 = vsel %vm243, %v240, %v242
    %vm245 = vcmp.eq.f32.partialorder %v240, 0.0
    %v246 = vand.u32 %v240, 2147483648
    %v247 = vsel %vm245, %v246, %v244
    %v248 = vmul.f32 %v231, %v231
    %v249 = vsel %vm237, %v248, 0.0
    %250 = vadd.xlane.f32.xlu0 %v249
    %v251 = vpop.xlane.xlu0 %250
    %v252 = vadd.f32 %v251, 1e-12
    %v253 = vrsqrt.pop %v252
    %v254 = vmul.f32 %v247, %v253
    %v255 = vmul.f32 %v231, %v254
    %v256 = vpack.c.bf16 %v255, %v255
    %v257 = vld [vmem:[#allocation7] sm:$0xf]
    %v258 = vld [vmem:[#allocation7 + $0x4] sm:$0xf]
    %v259 = vld [vmem:[#allocation7 + $0x8] sm:$0xf]
    %v260 = vld [vmem:[#allocation7 + $0xc] sm:$0xf]
    %v261 = vld [vmem:[#allocation7 + $0x10] sm:$0xf]
    %v262 = vld [vmem:[#allocation7 + $0x14] sm:$0xf]
    %v263 = vld [vmem:[#allocation7 + $0x18] sm:$0xf]
    %v264 = vld [vmem:[#allocation7 + $0x1c] sm:$0xf]
    %v265 = vld [vmem:[#allocation7 + $0x20] sm:$0xf]
    %v266 = vld [vmem:[#allocation7 + $0x24] sm:$0xf]
    %v267 = vld [vmem:[#allocation7 + $0x28] sm:$0xf]
    %v268 = vld [vmem:[#allocation7 + $0x2c] sm:$0xf]
    %v269 = vld [vmem:[#allocation7 + $0x30] sm:$0xf]
    %v270 = vld [vmem:[#allocation7 + $0x34] sm:$0xf]
    %v271 = vld [vmem:[#allocation7 + $0x38] sm:$0xf]
    %v272 = vld [vmem:[#allocation7 + $0x3c] sm:$0xf]
    %v273 = vld [vmem:[%s3] sm:$0x1]
    %v275 = vlaneseq
    %v276 = vshrl.u32 %v275, 7
    %v277 = vsub.s32 0, %v276
    %v278 = vrot.slane %v273, %v277
    %v296 = vunpack.c.l.b16 %v257
    %v297 = vunpack.c.l.b16 %v258
    %v298 = vunpack.c.l.b16 %v259
    %v299 = vunpack.c.l.b16 %v260
    %v300 = vunpack.c.l.b16 %v261
    %v301 = vunpack.c.l.b16 %v262
    %v302 = vunpack.c.l.b16 %v263
    %v303 = vunpack.c.l.b16 %v264
    %v304 = vunpack.c.l.b16 %v265
    %v305 = vunpack.c.l.b16 %v266
    %v306 = vunpack.c.l.b16 %v267
    %v307 = vunpack.c.l.b16 %v268
    %v308 = vunpack.c.l.b16 %v269
    %v309 = vunpack.c.l.b16 %v270
    %v310 = vunpack.c.l.b16 %v271
    %v311 = vunpack.c.l.b16 %v272
    %v312 = vpack.c.b16 %v297, %v296
    %v313 = vpack.c.b16 %v299, %v298
    %v314 = vpack.c.b16 %v301, %v300
    %v315 = vpack.c.b16 %v303, %v302
    %v316 = vpack.c.b16 %v305, %v304
    %v317 = vpack.c.b16 %v307, %v306
    %v318 = vpack.c.b16 %v309, %v308
    %v319 = vpack.c.b16 %v311, %v310
    %328 = vmatprep.subr.bf16.mxu0 0
    %329 = vmatpush1.bf16.msra.mxu0 %v319
    %330 = vmatprep.subr.bf16.mxu0 0
    %331 = vmatpush1.bf16.msra.mxu0 %v318
    %332 = vmatprep.subr.bf16.mxu0 0
    %333 = vmatpush1.bf16.msra.mxu0 %v317
    %334 = vmatprep.subr.bf16.mxu0 0
    %335 = vmatpush1.bf16.msra.mxu0 %v316
    %336 = vmatprep.subr.bf16.mxu0 0
    %337 = vmatpush1.bf16.msra.mxu0 %v315
    %338 = vmatprep.subr.bf16.mxu0 0
    %339 = vmatpush1.bf16.msra.mxu0 %v314
    %340 = vmatprep.subr.bf16.mxu0 0
    %341 = vmatpush1.bf16.msra.mxu0 %v313
    %342 = vmatprep.subr.bf16.mxu0 0
    %343 = vmatpush1.bf16.msra.mxu0 %v312
    %344 = vmatprep.subr.bf16.mxu0 0
    %345 = vmatpush2.bf16.msra.mxu0 0
    %346 = vmatprep.subr.bf16.mxu0 0
    %347 = vmatpush2.bf16.msra.mxu0 0
    %348 = vmatprep.subr.bf16.mxu0 0
    %349 = vmatpush2.bf16.msra.mxu0 0
    %350 = vmatprep.subr.bf16.mxu0 0
    %351 = vmatpush2.bf16.msra.mxu0 0
    %352 = vmatprep.subr.bf16.mxu0 0
    %353 = vmatpush2.bf16.msra.mxu0 0
    %354 = vmatprep.subr.bf16.mxu0 0
    %355 = vmatpush2.bf16.msra.mxu0 0
    %356 = vmatprep.subr.bf16.mxu0 0
    %357 = vmatpush2.bf16.msra.mxu0 0
    %358 = vmatprep.subr.bf16.mxu0 0
    %359 = vmatpush2.bf16.msra.mxu0 0
    %360 = vmatprep.mubr.bf16.mxu0 0
    %361 = vmatmul.mubr.bf16.gmra.mxu0 %v256
    %v362 = vpop.f32.mrf.mxu0
    %v363 = vadd.f32 %v278, %v362
    %v364 = vpop.f32.mrf.mxu0
    %v365 = vpop.f32.mrf.mxu0
    %v366 = vpop.f32.mrf.mxu0
    %367 = vdwg.mxu0
    %v368 = vmul.f32 %v363, %v363
    %v369 = vsel %vm237, %v368, 0.0
    %370 = vadd.xlane.f32.xlu0 %v369
    %v371 = vpop.xlane.xlu0 %370
    %v372 = vadd.f32 %v371, 1e-12
    %v373 = vrsqrt.pop %v372
    %v374 = vmul.f32 %v247, %v373
    %v375 = vmul.f32 %v363, %v374
    %v376 = vpack.c.bf16 %v375, %v375
    %v377 = vld [vmem:[#allocation8] sm:$0xf]
    %v378 = vld [vmem:[#allocation8 + $0x4] sm:$0xf]
    %v379 = vld [vmem:[#allocation8 + $0x8] sm:$0xf]
    %v380 = vld [vmem:[#allocation8 + $0xc] sm:$0xf]
    %v381 = vld [vmem:[#allocation8 + $0x10] sm:$0xf]
    %v382 = vld [vmem:[#allocation8 + $0x14] sm:$0xf]
    %v383 = vld [vmem:[#allocation8 + $0x18] sm:$0xf]
    %v384 = vld [vmem:[#allocation8 + $0x1c] sm:$0xf]
    %v385 = vld [vmem:[#allocation8 + $0x20] sm:$0xf]
    %v386 = vld [vmem:[#allocation8 + $0x24] sm:$0xf]
    %v387 = vld [vmem:[#allocation8 + $0x28] sm:$0xf]
    %v388 = vld [vmem:[#allocation8 + $0x2c] sm:$0xf]
    %v389 = vld [vmem:[#allocation8 + $0x30] sm:$0xf]
    %v390 = vld [vmem:[#allocation8 + $0x34] sm:$0xf]
    %v391 = vld [vmem:[#allocation8 + $0x38] sm:$0xf]
    %v392 = vld [vmem:[#allocation8 + $0x3c] sm:$0xf]
    %v393 = vand.u32 2147483647, %v375
    %v394 = vpack.c.bf16 %v393, %v393
    %v395 = vld [vmem:[#allocation10] sm:$0xf]
    %v396 = vld [vmem:[#allocation10 + $0x4] sm:$0xf]
    %v397 = vld [vmem:[#allocation10 + $0x8] sm:$0xf]
    %v398 = vld [vmem:[#allocation10 + $0xc] sm:$0xf]
    %v399 = vld [vmem:[#allocation10 + $0x10] sm:$0xf]
    %v400 = vld [vmem:[#allocation10 + $0x14] sm:$0xf]
    %v401 = vld [vmem:[#allocation10 + $0x18] sm:$0xf]
    %v402 = vld [vmem:[#allocation10 + $0x1c] sm:$0xf]
    %v403 = vld [vmem:[#allocation10 + $0x20] sm:$0xf]
    %v404 = vld [vmem:[#allocation10 + $0x24] sm:$0xf]
    %v405 = vld [vmem:[#allocation10 + $0x28] sm:$0xf]
    %v406 = vld [vmem:[#allocation10 + $0x2c] sm:$0xf]
    %v407 = vld [vmem:[#allocation10 + $0x30] sm:$0xf]
    %v408 = vld [vmem:[#allocation10 + $0x34] sm:$0xf]
    %v409 = vld [vmem:[#allocation10 + $0x38] sm:$0xf]
    %v410 = vld [vmem:[#allocation10 + $0x3c] sm:$0xf]
    %v427 = vunpack.c.l.b16 %v395
    %v428 = vunpack.c.l.b16 %v396
    %v429 = vunpack.c.l.b16 %v397
    %v430 = vunpack.c.l.b16 %v398
    %v431 = vunpack.c.l.b16 %v399
    %v432 = vunpack.c.l.b16 %v400
    %v433 = vunpack.c.l.b16 %v401
    %v434 = vunpack.c.l.b16 %v402
    %v435 = vunpack.c.l.b16 %v403
    %v436 = vunpack.c.l.b16 %v404
    %v437 = vunpack.c.l.b16 %v405
    %v438 = vunpack.c.l.b16 %v406
    %v439 = vunpack.c.l.b16 %v407
    %v440 = vunpack.c.l.b16 %v408
    %v441 = vunpack.c.l.b16 %v409
    %v442 = vunpack.c.l.b16 %v410
    %v443 = vpack.c.b16 %v428, %v427
    %v444 = vpack.c.b16 %v430, %v429
    %v445 = vpack.c.b16 %v432, %v431
    %v446 = vpack.c.b16 %v434, %v433
    %v447 = vpack.c.b16 %v436, %v435
    %v448 = vpack.c.b16 %v438, %v437
    %v449 = vpack.c.b16 %v440, %v439
    %v450 = vpack.c.b16 %v442, %v441
    %459 = vmatprep.subr.bf16.mxu0 0
    %460 = vmatpush1.bf16.msra.mxu0 %v450
    %461 = vmatprep.subr.bf16.mxu0 0
    %462 = vmatpush1.bf16.msra.mxu0 %v449
    %463 = vmatprep.subr.bf16.mxu0 0
    %464 = vmatpush1.bf16.msra.mxu0 %v448
    %465 = vmatprep.subr.bf16.mxu0 0
    %466 = vmatpush1.bf16.msra.mxu0 %v447
    %467 = vmatprep.subr.bf16.mxu0 0
    %468 = vmatpush1.bf16.msra.mxu0 %v446
    %469 = vmatprep.subr.bf16.mxu0 0
    %470 = vmatpush1.bf16.msra.mxu0 %v445
    %471 = vmatprep.subr.bf16.mxu0 0
    %472 = vmatpush1.bf16.msra.mxu0 %v444
    %473 = vmatprep.subr.bf16.mxu0 0
    %474 = vmatpush1.bf16.msra.mxu0 %v443
    %475 = vmatprep.subr.bf16.mxu0 0
    %476 = vmatpush2.bf16.msra.mxu0 0
    %477 = vmatprep.subr.bf16.mxu0 0
    %478 = vmatpush2.bf16.msra.mxu0 0
    %479 = vmatprep.subr.bf16.mxu0 0
    %480 = vmatpush2.bf16.msra.mxu0 0
    %481 = vmatprep.subr.bf16.mxu0 0
    %482 = vmatpush2.bf16.msra.mxu0 0
    %483 = vmatprep.subr.bf16.mxu0 0
    %484 = vmatpush2.bf16.msra.mxu0 0
    %485 = vmatprep.subr.bf16.mxu0 0
    %486 = vmatpush2.bf16.msra.mxu0 0
    %487 = vmatprep.subr.bf16.mxu0 0
    %488 = vmatpush2.bf16.msra.mxu0 0
    %489 = vmatprep.subr.bf16.mxu0 0
    %490 = vmatpush2.bf16.msra.mxu0 0
    %491 = vmatprep.mubr.bf16.mxu0 0
    %492 = vmatmul.mubr.bf16.gmra.mxu0 %v394
    %v493 = vpop.f32.mrf.mxu0
    %v494 = vadd.f32 0.0, %v493
    %v495 = vpop.f32.mrf.mxu0
    %v496 = vpop.f32.mrf.mxu0
    %v497 = vpop.f32.mrf.mxu0
    %498 = vdwg.mxu0
    %v515 = vunpack.c.l.b16 %v377
    %v516 = vunpack.c.l.b16 %v378
    %v517 = vunpack.c.l.b16 %v379
    %v518 = vunpack.c.l.b16 %v380
    %v519 = vunpack.c.l.b16 %v381
    %v520 = vunpack.c.l.b16 %v382
    %v521 = vunpack.c.l.b16 %v383
    %v522 = vunpack.c.l.b16 %v384
    %v523 = vunpack.c.l.b16 %v385
    %v524 = vunpack.c.l.b16 %v386
    %v525 = vunpack.c.l.b16 %v387
    %v526 = vunpack.c.l.b16 %v388
    %v527 = vunpack.c.l.b16 %v389
    %v528 = vunpack.c.l.b16 %v390
    %v529 = vunpack.c.l.b16 %v391
    %v530 = vunpack.c.l.b16 %v392
    %v531 = vpack.c.b16 %v516, %v515
    %v532 = vpack.c.b16 %v518, %v517
    %v533 = vpack.c.b16 %v520, %v519
    %v534 = vpack.c.b16 %v522, %v521
    %v535 = vpack.c.b16 %v524, %v523
    %v536 = vpack.c.b16 %v526, %v525
    %v537 = vpack.c.b16 %v528, %v527
    %v538 = vpack.c.b16 %v530, %v529
    %547 = vmatprep.subr.bf16.mxu0 0
    %548 = vmatpush1.bf16.msra.mxu0 %v538
    %549 = vmatprep.subr.bf16.mxu0 0
    %550 = vmatpush1.bf16.msra.mxu0 %v537
    %551 = vmatprep.subr.bf16.mxu0 0
    %552 = vmatpush1.bf16.msra.mxu0 %v536
    %553 = vmatprep.subr.bf16.mxu0 0
    %554 = vmatpush1.bf16.msra.mxu0 %v535
    %555 = vmatprep.subr.bf16.mxu0 0
    %556 = vmatpush1.bf16.msra.mxu0 %v534
    %557 = vmatprep.subr.bf16.mxu0 0
    %558 = vmatpush1.bf16.msra.mxu0 %v533
    %559 = vmatprep.subr.bf16.mxu0 0
    %560 = vmatpush1.bf16.msra.mxu0 %v532
    %561 = vmatprep.subr.bf16.mxu0 0
    %562 = vmatpush1.bf16.msra.mxu0 %v531
    %563 = vmatprep.subr.bf16.mxu0 0
    %564 = vmatpush2.bf16.msra.mxu0 0
    %565 = vmatprep.subr.bf16.mxu0 0
    %566 = vmatpush2.bf16.msra.mxu0 0
    %567 = vmatprep.subr.bf16.mxu0 0
    %568 = vmatpush2.bf16.msra.mxu0 0
    %569 = vmatprep.subr.bf16.mxu0 0
    %570 = vmatpush2.bf16.msra.mxu0 0
    %571 = vmatprep.subr.bf16.mxu0 0
    %572 = vmatpush2.bf16.msra.mxu0 0
    %573 = vmatprep.subr.bf16.mxu0 0
    %574 = vmatpush2.bf16.msra.mxu0 0
    %575 = vmatprep.subr.bf16.mxu0 0
    %576 = vmatpush2.bf16.msra.mxu0 0
    %577 = vmatprep.subr.bf16.mxu0 0
    %578 = vmatpush2.bf16.msra.mxu0 0
    %579 = vmatprep.mubr.bf16.mxu0 0
    %580 = vmatmul.mubr.bf16.gmra.mxu0 %v376
    %v581 = vpop.f32.mrf.mxu0
    %v582 = vadd.f32 %v494, %v581
    %v583 = vpop.f32.mrf.mxu0
    %v584 = vpop.f32.mrf.mxu0
    %v585 = vpop.f32.mrf.mxu0
    %586 = vdwg.mxu0
    %v587 = vld [vmem:[%s6] sm:$0x1]
    %v589 = vlaneseq
    %v590 = vshrl.u32 %v589, 7
    %v591 = vsub.s32 0, %v590
    %v592 = vrot.slane %v587, %v591
    %v594 = vadd.f32 %v582, %v592
    %v595 = vmul.f32 %v594, %v594
    %v596 = vsel %vm237, %v595, 0.0
    %597 = vadd.xlane.f32.xlu0 %v596
    %v598 = vpop.xlane.xlu0 %597
    %v599 = vadd.f32 %v598, 1e-12
    %v600 = vrsqrt.pop %v599
    %v601 = vmul.f32 %v247, %v600
    %v602 = vmul.f32 %v594, %v601
    %v603 = vpack.c.bf16 %v602, %v602
    %v604 = vld [vmem:[#allocation11] sm:$0xf]
    %v605 = vld [vmem:[#allocation11 + $0x4] sm:$0xf]
    %v606 = vld [vmem:[#allocation11 + $0x8] sm:$0xf]
    %v607 = vld [vmem:[#allocation11 + $0xc] sm:$0xf]
    %v608 = vld [vmem:[#allocation11 + $0x10] sm:$0xf]
    %v609 = vld [vmem:[#allocation11 + $0x14] sm:$0xf]
    %v610 = vld [vmem:[#allocation11 + $0x18] sm:$0xf]
    %v611 = vld [vmem:[#allocation11 + $0x1c] sm:$0xf]
    %v612 = vld [vmem:[#allocation11 + $0x20] sm:$0xf]
    %v613 = vld [vmem:[#allocation11 + $0x24] sm:$0xf]
    %v614 = vld [vmem:[#allocation11 + $0x28] sm:$0xf]
    %v615 = vld [vmem:[#allocation11 + $0x2c] sm:$0xf]
    %v616 = vld [vmem:[#allocation11 + $0x30] sm:$0xf]
    %v617 = vld [vmem:[#allocation11 + $0x34] sm:$0xf]
    %v618 = vld [vmem:[#allocation11 + $0x38] sm:$0xf]
    %v619 = vld [vmem:[#allocation11 + $0x3c] sm:$0xf]
    %v620 = vld [vmem:[%s8] sm:$0x1]
    %v622 = vlaneseq
    %v623 = vshrl.u32 %v622, 7
    %v624 = vsub.s32 0, %v623
    %v625 = vrot.slane %v620, %v624
    %v643 = vunpack.c.l.b16 %v604
    %v644 = vunpack.c.l.b16 %v605
    %v645 = vunpack.c.l.b16 %v606
    %v646 = vunpack.c.l.b16 %v607
    %v647 = vunpack.c.l.b16 %v608
    %v648 = vunpack.c.l.b16 %v609
    %v649 = vunpack.c.l.b16 %v610
    %v650 = vunpack.c.l.b16 %v611
    %v651 = vunpack.c.l.b16 %v612
    %v652 = vunpack.c.l.b16 %v613
    %v653 = vunpack.c.l.b16 %v614
    %v654 = vunpack.c.l.b16 %v615
    %v655 = vunpack.c.l.b16 %v616
    %v656 = vunpack.c.l.b16 %v617
    %v657 = vunpack.c.l.b16 %v618
    %v658 = vunpack.c.l.b16 %v619
    %v659 = vpack.c.b16 %v644, %v643
    %v660 = vpack.c.b16 %v646, %v645
    %v661 = vpack.c.b16 %v648, %v647
    %v662 = vpack.c.b16 %v650, %v649
    %v663 = vpack.c.b16 %v652, %v651
    %v664 = vpack.c.b16 %v654, %v653
    %v665 = vpack.c.b16 %v656, %v655
    %v666 = vpack.c.b16 %v658, %v657
    %675 = vmatprep.subr.bf16.mxu0 0
    %676 = vmatpush1.bf16.msra.mxu0 %v666
    %677 = vmatprep.subr.bf16.mxu0 0
    %678 = vmatpush1.bf16.msra.mxu0 %v665
    %679 = vmatprep.subr.bf16.mxu0 0
    %680 = vmatpush1.bf16.msra.mxu0 %v664
    %681 = vmatprep.subr.bf16.mxu0 0
    %682 = vmatpush1.bf16.msra.mxu0 %v663
    %683 = vmatprep.subr.bf16.mxu0 0
    %684 = vmatpush1.bf16.msra.mxu0 %v662
    %685 = vmatprep.subr.bf16.mxu0 0
    %686 = vmatpush1.bf16.msra.mxu0 %v661
    %687 = vmatprep.subr.bf16.mxu0 0
    %688 = vmatpush1.bf16.msra.mxu0 %v660
    %689 = vmatprep.subr.bf16.mxu0 0
    %690 = vmatpush1.bf16.msra.mxu0 %v659
    %691 = vmatprep.subr.bf16.mxu0 0
    %692 = vmatpush2.bf16.msra.mxu0 0
    %693 = vmatprep.subr.bf16.mxu0 0
    %694 = vmatpush2.bf16.msra.mxu0 0
    %695 = vmatprep.subr.bf16.mxu0 0
    %696 = vmatpush2.bf16.msra.mxu0 0
    %697 = vmatprep.subr.bf16.mxu0 0
    %698 = vmatpush2.bf16.msra.mxu0 0
    %699 = vmatprep.subr.bf16.mxu0 0
    %700 = vmatpush2.bf16.msra.mxu0 0
    %701 = vmatprep.subr.bf16.mxu0 0
    %702 = vmatpush2.bf16.msra.mxu0 0
    %703 = vmatprep.subr.bf16.mxu0 0
    %704 = vmatpush2.bf16.msra.mxu0 0
    %705 = vmatprep.subr.bf16.mxu0 0
    %706 = vmatpush2.bf16.msra.mxu0 0
    %707 = vmatprep.mubr.bf16.mxu0 0
    %708 = vmatmul.mubr.bf16.gmra.mxu0 %v603
    %v709 = vpop.f32.mrf.mxu0
    %v710 = vadd.f32 %v625, %v709
    %v711 = vpop.f32.mrf.mxu0
    %v712 = vpop.f32.mrf.mxu0
    %v713 = vpop.f32.mrf.mxu0
    %714 = vdwg.mxu0
    %v715 = vmul.f32 %v710, %v710
    %v716 = vsel %vm237, %v715, 0.0
    %717 = vadd.xlane.f32.xlu0 %v716
    %v718 = vpop.xlane.xlu0 %717
    %v719 = vadd.f32 %v718, 1e-12
    %v720 = vrsqrt.pop %v719
    %v721 = vmul.f32 %v247, %v720
    %v722 = vmul.f32 %v710, %v721
    %v723 = vpack.c.bf16 %v722, %v722
    %v724 = vld [vmem:[#allocation13] sm:$0xf]
    %v725 = vld [vmem:[#allocation13 + $0x4] sm:$0xf]
    %v726 = vld [vmem:[#allocation13 + $0x8] sm:$0xf]
    %v727 = vld [vmem:[#allocation13 + $0xc] sm:$0xf]
    %v728 = vld [vmem:[#allocation13 + $0x10] sm:$0xf]
    %v729 = vld [vmem:[#allocation13 + $0x14] sm:$0xf]
    %v730 = vld [vmem:[#allocation13 + $0x18] sm:$0xf]
    %v731 = vld [vmem:[#allocation13 + $0x1c] sm:$0xf]
    %v732 = vld [vmem:[#allocation13 + $0x20] sm:$0xf]
    %v733 = vld [vmem:[#allocation13 + $0x24] sm:$0xf]
    %v734 = vld [vmem:[#allocation13 + $0x28] sm:$0xf]
    %v735 = vld [vmem:[#allocation13 + $0x2c] sm:$0xf]
    %v736 = vld [vmem:[#allocation13 + $0x30] sm:$0xf]
    %v737 = vld [vmem:[#allocation13 + $0x34] sm:$0xf]
    %v738 = vld [vmem:[#allocation13 + $0x38] sm:$0xf]
    %v739 = vld [vmem:[#allocation13 + $0x3c] sm:$0xf]
    %v756 = vunpack.c.l.b16 %v724
    %v757 = vunpack.c.l.b16 %v725
    %v758 = vunpack.c.l.b16 %v726
    %v759 = vunpack.c.l.b16 %v727
    %v760 = vunpack.c.l.b16 %v728
    %v761 = vunpack.c.l.b16 %v729
    %v762 = vunpack.c.l.b16 %v730
    %v763 = vunpack.c.l.b16 %v731
    %v764 = vunpack.c.l.b16 %v732
    %v765 = vunpack.c.l.b16 %v733
    %v766 = vunpack.c.l.b16 %v734
    %v767 = vunpack.c.l.b16 %v735
    %v768 = vunpack.c.l.b16 %v736
    %v769 = vunpack.c.l.b16 %v737
    %v770 = vunpack.c.l.b16 %v738
    %v771 = vunpack.c.l.b16 %v739
    %v772 = vpack.c.b16 %v757, %v756
    %v773 = vpack.c.b16 %v759, %v758
    %v774 = vpack.c.b16 %v761, %v760
    %v775 = vpack.c.b16 %v763, %v762
    %v776 = vpack.c.b16 %v765, %v764
    %v777 = vpack.c.b16 %v767, %v766
    %v778 = vpack.c.b16 %v769, %v768
    %v779 = vpack.c.b16 %v771, %v770
    %788 = vmatprep.subr.bf16.mxu0 0
    %789 = vmatpush1.bf16.msra.mxu0 %v779
    %790 = vmatprep.subr.bf16.mxu0 0
    %791 = vmatpush1.bf16.msra.mxu0 %v778
    %792 = vmatprep.subr.bf16.mxu0 0
    %793 = vmatpush1.bf16.msra.mxu0 %v777
    %794 = vmatprep.subr.bf16.mxu0 0
    %795 = vmatpush1.bf16.msra.mxu0 %v776
    %796 = vmatprep.subr.bf16.mxu0 0
    %797 = vmatpush1.bf16.msra.mxu0 %v775
    %798 = vmatprep.subr.bf16.mxu0 0
    %799 = vmatpush1.bf16.msra.mxu0 %v774
    %800 = vmatprep.subr.bf16.mxu0 0
    %801 = vmatpush1.bf16.msra.mxu0 %v773
    %802 = vmatprep.subr.bf16.mxu0 0
    %803 = vmatpush1.bf16.msra.mxu0 %v772
    %804 = vmatprep.subr.bf16.mxu0 0
    %805 = vmatpush2.bf16.msra.mxu0 0
    %806 = vmatprep.subr.bf16.mxu0 0
    %807 = vmatpush2.bf16.msra.mxu0 0
    %808 = vmatprep.subr.bf16.mxu0 0
    %809 = vmatpush2.bf16.msra.mxu0 0
    %810 = vmatprep.subr.bf16.mxu0 0
    %811 = vmatpush2.bf16.msra.mxu0 0
    %812 = vmatprep.subr.bf16.mxu0 0
    %813 = vmatpush2.bf16.msra.mxu0 0
    %814 = vmatprep.subr.bf16.mxu0 0
    %815 = vmatpush2.bf16.msra.mxu0 0
    %816 = vmatprep.subr.bf16.mxu0 0
    %817 = vmatpush2.bf16.msra.mxu0 0
    %818 = vmatprep.subr.bf16.mxu0 0
    %819 = vmatpush2.bf16.msra.mxu0 0
    %820 = vmatprep.mubr.bf16.mxu0 0
    %821 = vmatmul.mubr.bf16.gmra.mxu0 %v723
    %v822 = vpop.f32.mrf.mxu0
    %v823 = vadd.f32 0.0, %v822
    %v824 = vpop.f32.mrf.mxu0
    %v825 = vpop.f32.mrf.mxu0
    %v826 = vpop.f32.mrf.mxu0
    %827 = vdwg.mxu0
    %828 = vst [vmem:[#allocation14] sm:$0xf] %v823
    // Predicated region
    $region70: #{tpu_custom_call.1} parent=1 // pred_check
      _
    $region71: #{tpu_custom_call.1} parent=1 // pred_check_branch
      %830 = sbr.rel (0) target = $region73
    $region72: #{tpu_custom_call.1} parent=1 // pred_region
      %s832 = ssub.s32 64, 64
      %833 = vsyncadd [#allocation4], %s832
      %s835 = sshll.u32 [#allocation14], 4
      %s836 = int_to_ptr.vmem [resolvable:$true] %s835
      %838 = dma.vmem_to_hbm [thread:$0]  %s836, 64, %s10, [#allocation4]
    $region73: #{tpu_custom_call.1} parent=1 // pred_fallthru
      _
    // Predicated region
    $region74: #{tpu_custom_call.1} parent=1 // pred_check
      _
    $region75: #{tpu_custom_call.1} parent=1 // pred_check_branch
      %840 = sbr.rel (0) target = $region77
    $region76: #{tpu_custom_call.1} parent=1 // pred_region
      %841 = dma.done [#allocation4], 64
    $region77: #{tpu_custom_call.1} parent=1 // pred_fallthru
      _
    %842 = vsyncpa [#allocation3], 1
    %843 = vsyncpa [#allocation6], 1
    %844 = vsyncpa [#allocation9], 1
    %845 = vsyncpa [#allocation12], 1
    %846 = vsyncpa [#allocation4], 1

</llo_original>
